<compile_context>
chip_gen: v5e
topology: v5e:2x2
jax: 0.10.0
libtpu: 0.0.40
codegen_flags: <defaults>
</compile_context>

<pallas_src>
import jax
import jax.numpy as jnp
from jax.experimental import pallas as pl
from jax.experimental.pallas import tpu as pltpu


def _scaling_kernel(params_ref, x_ref, o_ref):
    # params_ref: (TR, 2) f32 tile -> column 0 = shift, column 1 = 1/scale.
    # x_ref / o_ref: (TR, TL) tiles of the flattened (B*C, H*W) view.
    p = params_ref[...]                       # (TR, 2) float32
    sh = p[:, 0:1]                            # (TR, 1)
    isc = p[:, 1:2]                           # (TR, 1)
    xf = x_ref[...].astype(jnp.float32)       # compute in f32 (VPU has slack)
    o_ref[...] = ((xf - sh) * isc).astype(o_ref.dtype)


def _default_target_tile_bytes():
    """Per-buffer tile budget: fatter tiles on v7x (faster HBM amortizes the
    fixed ~0.35us/step overhead), conservative elsewhere."""
    try:
        kind = jax.devices()[0].device_kind.lower()
    except Exception:
        kind = ""
    if any(tag in kind for tag in ("v7", "7x", "tpu7")):
        return 4 * 1024 * 1024
    return 2 * 1024 * 1024


def scaling_layer(x, shift, scale, *, min_pallas_bytes=1 << 20):
    """out = (x - shift) / scale.  x: (B, C, H, W); shift, scale: (C,)."""
    B, C, H, W = x.shape
    assert shift.shape == (C,) and scale.shape == (C,)

    shift_f = shift.astype(jnp.float32)
    inv_scale = 1.0 / scale.astype(jnp.float32)   # exact reciprocal (wrapper-side)

    itemsize = jnp.dtype(x.dtype).itemsize
    total_bytes = x.size * itemsize

    def _fallback():
        xf = x.astype(jnp.float32)
        out = (xf - shift_f[None, :, None, None]) * inv_scale[None, :, None, None]
        return out.astype(x.dtype)

    # Tiny inputs: kernel launch / per-step overhead dominates; let XLA fuse it.
    if total_bytes < min_pallas_bytes:
        return _fallback()

    R = B * C          # rows of the flattened view
    L = H * W          # lane-dense last dim
    x2 = x.reshape(R, L)

    # ---------------- tile selection ----------------
    LANE = 128
    sub = max(8, 32 // itemsize)            # 8 (f32), 16 (bf16), 32 (int8/fp8)
    target_tile_bytes = _default_target_tile_bytes()

    # Lane tile: multiple of 128 (or the full, possibly unaligned, H*W).
    if L % LANE != 0:
        tl = L
    else:
        tl = min(L, 64 * 1024)              # <= 64K lanes/tile, always 128-aligned

    # Row tile: multiple of the packed-sublane count (or the full row dim).
    if R <= sub:
        tr = R
    else:
        rows = max(1, target_tile_bytes // (itemsize * tl))
        tr = min((rows // sub) * sub, (R // sub) * sub)
        tr = max(tr, sub)

    # Prefer >= 4 total grid steps on large inputs (>= 2 pipelined steps per
    # v7x TensorCore); stop before tiles drop below ~512 KiB (still ~85% of
    # the measured HBM roofline).
    min_tile_bytes = 512 * 1024

    def _steps(tr_, tl_):
        return pl.cdiv(R, tr_) * pl.cdiv(L, tl_)

    for _ in range(8):
        if _steps(tr, tl) >= 4:
            break
        if tr >= 2 * sub and (tr // 2) * tl * itemsize >= min_tile_bytes:
            tr = max(sub, ((tr // 2) // sub) * sub)
        elif L % LANE == 0 and tl >= 2 * LANE and tr * (tl // 2) * itemsize >= min_tile_bytes:
            tl = max(LANE, ((tl // 2) // LANE) * LANE)
        else:
            break

    tile_bytes = tr * tl * itemsize
    # VMEM budget: x + out tiles double-buffered, plus room for the f32
    # elementwise temporaries and the tiny params tile.
    vmem_needed = 4 * tile_bytes + 3 * tr * tl * 4 + (4 << 20)
    if vmem_needed > (48 << 20):
        # Pathological case (huge, non-128-aligned H*W): not worth a custom path.
        return _fallback()
    vmem_limit = int(min(48 << 20, max(16 << 20, vmem_needed)))

    # Per-row (shift, 1/scale) merged into one tiny f32 input. Row order
    # matches the NCHW -> (B*C, H*W) reshape (channel repeats every C rows).
    params = jnp.stack([jnp.tile(shift_f, B), jnp.tile(inv_scale, B)], axis=1)  # (R, 2)

    grid = (pl.cdiv(R, tr), pl.cdiv(L, tl))   # lane-tile axis innermost

    out2 = pl.pallas_call(
        _scaling_kernel,
        out_shape=jax.ShapeDtypeStruct((R, L), x.dtype),
        grid=grid,
        in_specs=[
            pl.BlockSpec((tr, 2), lambda i, j: (i, 0)),    # per-row params
            pl.BlockSpec((tr, tl), lambda i, j: (i, j)),   # x tile
        ],
        out_specs=pl.BlockSpec((tr, tl), lambda i, j: (i, j)),
        compiler_params=pltpu.CompilerParams(
            dimension_semantics=("parallel", "parallel"),
            vmem_limit_bytes=vmem_limit,
        ),
    )(params, x2)

    return out2.reshape(B, C, H, W)


if __name__ == "__main__":
    # Buffers from the module __init__ (torch shape (1,3,1,1), stored flat).
    shift = jnp.array([-0.030, -0.088, -0.188], dtype=jnp.float32)
    scale = jnp.array([0.458, 0.448, 0.450], dtype=jnp.float32)

    key = jax.random.PRNGKey(0)
    k1, k2, k3 = jax.random.split(key, 3)

    def ref_fn(x):
        return (x.astype(jnp.float32) - shift[None, :, None, None]) / scale[None, :, None, None]

    # 1) Small NCHW input, forced through the Pallas path (single tile).
    x1 = jax.random.normal(k1, (2, 3, 16, 16), dtype=jnp.float32)
    out1 = jax.block_until_ready(scaling_layer(x1, shift, scale, min_pallas_bytes=0))
    assert out1.shape == x1.shape and out1.dtype == x1.dtype
    assert jnp.allclose(out1, ref_fn(x1), atol=1e-5, rtol=1e-5)

    # 2) Multi-step grid with a ragged row tail (R=12 -> row tiles of 8, 8+4).
    x2 = jax.random.normal(k2, (4, 3, 96, 128), dtype=jnp.float32)
    out2 = jax.block_until_ready(scaling_layer(x2, shift, scale, min_pallas_bytes=0))
    assert jnp.allclose(out2, ref_fn(x2), atol=1e-5, rtol=1e-5)

    # 3) bf16 input: exercises the dtype-aware 16-row packed-sublane tiling.
    x3 = jax.random.normal(k3, (8, 3, 32, 128), dtype=jnp.float32).astype(jnp.bfloat16)
    out3 = jax.block_until_ready(scaling_layer(x3, shift, scale, min_pallas_bytes=0))
    assert out3.dtype == jnp.bfloat16
    ref3 = ref_fn(x3.astype(jnp.float32)).astype(jnp.bfloat16).astype(jnp.float32)
    assert jnp.allclose(out3.astype(jnp.float32), ref3, atol=1e-2, rtol=1e-2)

    # 4) Tiny-input fallback path (default threshold) still matches.
    out4 = jax.block_until_ready(scaling_layer(x1, shift, scale))
    assert jnp.allclose(out4, ref_fn(x1), atol=1e-5, rtol=1e-5)

    print("KERNEL_OK")
</pallas_src>

<mosaic_0001>
module attributes {stable_mosaic.version = 11 : i64} {
  func.func @_scaling_kernel(%arg0: i32, %arg1: i32, %arg2: memref<6x2xf32, #tpu.memory_space<vmem>>, %arg3: memref<6x256xf32, #tpu.memory_space<vmem>>, %arg4: memref<6x256xf32, #tpu.memory_space<vmem>>) attributes {dimension_semantics = [#tpu.dimension_semantics<parallel>, #tpu.dimension_semantics<parallel>], iteration_bounds = array<i64: 1, 1>, scalar_prefetch = 0 : i64, scratch_operands = 0 : i64, tpu.core_type = #tpu.core_type<tc>, window_params = [{transform_indices = @transform_0, window_bounds = array<i64: 6, 2>}, {transform_indices = @transform_1, window_bounds = array<i64: 6, 256>}, {transform_indices = @transform_2, window_bounds = array<i64: 6, 256>}]} {
    %c0 = arith.constant 0 : index
    %c0_0 = arith.constant 0 : index
    %0 = vector.load %arg2[%c0, %c0_0] : memref<6x2xf32, #tpu.memory_space<vmem>>, vector<6x2xf32>
    %1 = vector.extract_strided_slice %0 {offsets = [0, 0], sizes = [6, 1], strides = [1, 1]} : vector<6x2xf32> to vector<6x1xf32>
    %2 = vector.extract_strided_slice %0 {offsets = [0, 1], sizes = [6, 1], strides = [1, 1]} : vector<6x2xf32> to vector<6x1xf32>
    %c0_1 = arith.constant 0 : index
    %c0_2 = arith.constant 0 : index
    %3 = vector.load %arg3[%c0_1, %c0_2] : memref<6x256xf32, #tpu.memory_space<vmem>>, vector<6x256xf32>
    %4 = vector.broadcast %1 : vector<6x1xf32> to vector<6x256xf32>
    %5 = arith.subf %3, %4 : vector<6x256xf32>
    %6 = vector.broadcast %2 : vector<6x1xf32> to vector<6x256xf32>
    %7 = arith.mulf %5, %6 : vector<6x256xf32>
    %c0_3 = arith.constant 0 : index
    %c0_4 = arith.constant 0 : index
    %8 = vector.load %arg4[%c0_3, %c0_4] : memref<6x256xf32, #tpu.memory_space<vmem>>, vector<6x256xf32>
    tpu.vector_store %arg4[%c0_3, %c0_4], %7 {strides = array<i32>} : memref<6x256xf32, #tpu.memory_space<vmem>>, vector<6x256xf32>,
    return
  }
  func.func @transform_0(%arg0: i32, %arg1: i32) -> (i32, i32) {
    %c0_i32 = arith.constant 0 : i32
    %c0_i32_0 = arith.constant 0 : i32
    return %arg0, %c0_i32 : i32, i32
  }
  func.func @transform_1(%arg0: i32, %arg1: i32) -> (i32, i32) {
    %c0_i32 = arith.constant 0 : i32
    return %arg0, %arg1 : i32, i32
  }
  func.func @transform_2(%arg0: i32, %arg1: i32) -> (i32, i32) {
    %c0_i32 = arith.constant 0 : i32
    return %arg0, %arg1 : i32, i32
  }
}

</mosaic_0001>

<llo_original>
// kernel: tpu_custom_call.1
$region0: #{tpu_custom_call.1}
  #allocation0 [shape = 'u32[]', space=smem, size = 0x4, offset = 0x4, fixed_abs, tag = 'smem constant byte address 0x4 - core index']
  #allocation1 [shape = 'u32[72,128]{1,0:T(1,128)}', space=vmem, size = 0x9000, scoped, tag = 'internal scratch']
  %s0 = inlined_call_operand.vmem [shape: f32[6,2], index: 0, kind: input, shape index: {}]
  %s1 = inlined_call_operand.hbm [shape: f32[6,256], index: 1, kind: input, shape index: {}]
  %s2 = inlined_call_operand.hbm [shape: f32[6,256], index: 2, kind: output, shape index: {}]
  %s3 = sld [smem:[#allocation0]]
  $region22: #{tpu_custom_call.1} parent=0
    _
  %s5 = ssub.s32 1, %s3
  %s6 = scalar_select 0, %s5, %s3
  $region1: #{tpu_custom_call.1} parent=0
    #allocation2 [shape = 'u8[8192]{0}', space=vmem, size = 0x2000, scoped, tag = 'input window, operand 1, single buffered']
    #allocation3 [shape = 's32[1]{0}', space=sflag, size = 0x4, scoped, tag = 'scoped memory for tpu_custom_call.1']
    #allocation4 [shape = 's32[1]{0}', space=sflag, size = 0x4, scoped, tag = 'scoped memory for tpu_custom_call.1']
    #allocation5 [shape = 'u8[8192]{0}', space=vmem, size = 0x2000, scoped, tag = 'output window, operand 0, single buffered']
    %7 = vsyncpa [#allocation3], 0
    %8 = vsyncpa [#allocation4], 0
    // Predicated region
    $region2: #{tpu_custom_call.1} parent=1 // pred_check
      _
    $region3: #{tpu_custom_call.1} parent=1 // pred_check_branch
      %10 = sbr.rel (0) target = $region5
    $region4: #{tpu_custom_call.1} parent=1 // pred_region
      _
    $region5: #{tpu_custom_call.1} parent=1 // pred_fallthru
      _
    // Predicated region
    $region6: #{tpu_custom_call.1} parent=1 // pred_check
      _
    $region7: #{tpu_custom_call.1} parent=1 // pred_check_branch
      %12 = sbr.rel (0) target = $region9
    $region8: #{tpu_custom_call.1} parent=1 // pred_region
      %14 = vsyncadd [#allocation3], 0
      %s16 = sshll.u32 %s1, 4
      %s17 = int_to_ptr.hbm [resolvable:$true] %s16
      %s18 = sshll.u32 [#allocation2], 4
      %s19 = int_to_ptr.vmem [resolvable:$true] %s18
      %21 = dma.hbm_to_vmem [thread:$0]  %s17, 256, %s19, [#allocation3]
    $region9: #{tpu_custom_call.1} parent=1 // pred_fallthru
      _
    // Predicated region
    $region10: #{tpu_custom_call.1} parent=1 // pred_check
      _
    $region11: #{tpu_custom_call.1} parent=1 // pred_check_branch
      %23 = sbr.rel (0) target = $region13
    $region12: #{tpu_custom_call.1} parent=1 // pred_region
      %25 = dma.done [#allocation3], 256
    $region13: #{tpu_custom_call.1} parent=1 // pred_fallthru
      _
    %v26 = vld [vmem:[%s0] sm:$0x3f]
    %v27 = vld [vmem:[#allocation2] sm:$0x3f]
    %v28 = vld [vmem:[#allocation2 + $0x8] sm:$0x3f]
    %30 = vset.pattern.permute.xlu0 0
    %31 = vperm.xlu0 %30, %v26
    %v32 = vpop.permute.xlu0 %31
    %v34 = vsub.f32 %v27, %v32
    %v35 = vsub.f32 %v28, %v32
    %36 = vset.pattern.permute.xlu0 1
    %37 = vperm.xlu0 %36, %v26
    %v38 = vpop.permute.xlu0 %37
    %v40 = vmul.f32 %v34, %v38
    %v41 = vmul.f32 %v35, %v38
    %42 = vst [vmem:[#allocation5] sm:$0x3f] %v40
    %43 = vst [vmem:[#allocation5 + $0x8] sm:$0x3f] %v41
    // Predicated region
    $region14: #{tpu_custom_call.1} parent=1 // pred_check
      _
    $region15: #{tpu_custom_call.1} parent=1 // pred_check_branch
      %45 = sbr.rel (0) target = $region17
    $region16: #{tpu_custom_call.1} parent=1 // pred_region
      %47 = vsyncadd [#allocation4], 0
      %s49 = sshll.u32 [#allocation5], 4
      %s50 = int_to_ptr.vmem [resolvable:$true] %s49
      %s51 = sshll.u32 %s2, 4
      %s52 = int_to_ptr.hbm [resolvable:$true] %s51
      %54 = dma.vmem_to_hbm [thread:$0]  %s50, 256, %s52, [#allocation4]
    $region17: #{tpu_custom_call.1} parent=1 // pred_fallthru
      _
    // Predicated region
    $region18: #{tpu_custom_call.1} parent=1 // pred_check
      _
    $region19: #{tpu_custom_call.1} parent=1 // pred_check_branch
      %56 = sbr.rel (0) target = $region21
    $region20: #{tpu_custom_call.1} parent=1 // pred_region
      %58 = dma.done [#allocation4], 256
    $region21: #{tpu_custom_call.1} parent=1 // pred_fallthru
      _
    %59 = vsyncpa [#allocation3], 1
    %60 = vsyncpa [#allocation4], 1

</llo_original>
